<compile_context>
chip_gen: v5e
topology: v5e:2x2
jax: 0.10.0
libtpu: 0.0.40
codegen_flags: <defaults>
</compile_context>

<pallas_src>
import jax
import jax.numpy as jnp
from jax.experimental import pallas as pl
from jax.experimental.pallas import tpu as pltpu

_VMEM_LIMIT_BYTES = 48 * 1024 * 1024    # safe on v7x (64 MiB phys); raises v5e/v6e defaults
_BLOCK_BUDGET_BYTES = 36 * 1024 * 1024  # budget for 2x input + 2x output pipelined blocks


def _se_kernel(x_ref, w1_ref, w2_ref, o_ref):
    # x_ref block: (TB, HW, C) with C on the lane axis.
    # w1_ref: (C, Cr)   w2_ref: (Cr, C)
    #
    # Squeeze: global average pool over the spatial (sublane) axis.
    # (For mem-bound shapes this XLU reduce hides under the HBM DMA; if a
    #  bundle dump ever shows it on the critical path, swap in a ones/HW
    #  matmul to push the reduction onto the otherwise-idle MXU.)
    y = jnp.mean(x_ref[...], axis=1)                                   # (TB, C)

    # Excitation: fc1 -> ReLU -> fc2 -> sigmoid (small MXU matmuls, M=TB).
    h = jnp.dot(y, w1_ref[...], preferred_element_type=jnp.float32)    # (TB, Cr)
    h = jnp.maximum(h, 0.0)
    s = jnp.dot(h, w2_ref[...], preferred_element_type=jnp.float32)    # (TB, C)
    s = jax.nn.sigmoid(s)

    # Scale: re-read x from the resident VMEM block (don't keep the whole tile
    # live in vregs across the excitation).  The gate broadcasts over the
    # spatial (sublane) axis; stores are lane-dense in C.
    o_ref[...] = (x_ref[...] * s[:, None, :]).astype(o_ref.dtype)


def _choose_batch_block(B, C, HW, itemsize):
    """Largest TB dividing B such that pipelined blocks fit the VMEM budget,
    keeping >= 2 grid steps when possible (so v7x megacore sharding helps)."""
    per_image = C * HW * itemsize
    tb = max(1, _BLOCK_BUDGET_BYTES // (4 * per_image))   # 2 in + 2 out buffers
    if B >= 2:
        tb = min(tb, B // 2)
    tb = max(1, min(tb, B))
    while B % tb != 0:
        tb -= 1
    return tb


def se_layer(x, w1, w2):
    """SE forward. x: (B, C, H, W) float32; w1: (C, C//r); w2: (C//r, C)."""
    B, C, H, W = x.shape
    HW = H * W
    # NCHW -> (B, HW, C): channels become the lane axis (layout plumbing).
    x_t = x.reshape(B, C, HW).transpose(0, 2, 1)
    TB = _choose_batch_block(B, C, HW, x.dtype.itemsize)

    out_t = pl.pallas_call(
        _se_kernel,
        out_shape=jax.ShapeDtypeStruct((B, HW, C), x.dtype),
        grid_spec=pltpu.PrefetchScalarGridSpec(
            num_scalar_prefetch=0,
            grid=(B // TB,),
            in_specs=[
                pl.BlockSpec((TB, HW, C), lambda b: (b, 0, 0)),
                pl.BlockSpec(w1.shape, lambda b: (0, 0)),
                pl.BlockSpec(w2.shape, lambda b: (0, 0)),
            ],
            out_specs=pl.BlockSpec((TB, HW, C), lambda b: (b, 0, 0)),
        ),
        compiler_params=pltpu.CompilerParams(
            dimension_semantics=("parallel",),
            vmem_limit_bytes=_VMEM_LIMIT_BYTES,
        ),
    )(x_t, w1, w2)

    # (B, HW, C) -> NCHW
    return out_t.transpose(0, 2, 1).reshape(B, C, H, W)


def se_layer_ref(x, w1, w2):
    """Pure-JAX reference mirroring the PyTorch forward."""
    y = jnp.mean(x, axis=(2, 3))                     # (B, C)
    h = jnp.maximum(y @ w1, 0.0)                     # (B, C//r)
    s = jax.nn.sigmoid(h @ w2)                       # (B, C)
    return x * s[:, :, None, None]


if __name__ == "__main__":
    # Small shapes consistent with the module: channel=32, reduction=16.
    B, C, H, W = 2, 32, 8, 8
    reduction = 16
    Cr = C // reduction

    key = jax.random.PRNGKey(0)
    kx, k1, k2 = jax.random.split(key, 3)

    x = jax.random.normal(kx, (B, C, H, W), dtype=jnp.float32)
    # PyTorch Linear(channel, channel//r, bias=False) weight is (out, in);
    # we store the transposed (in, out) layout so the kernel does y @ w.
    w1 = jax.random.normal(k1, (C, Cr), dtype=jnp.float32) * 0.1
    w2 = jax.random.normal(k2, (Cr, C), dtype=jnp.float32) * 0.1

    out = se_layer(x, w1, w2)
    out = jax.block_until_ready(out)

    ref = se_layer_ref(x, w1, w2)
    assert out.shape == (B, C, H, W)
    assert jnp.allclose(out, ref, atol=1e-5, rtol=1e-5)

    print("KERNEL_OK")
</pallas_src>

<mosaic_0001>
module attributes {stable_mosaic.version = 11 : i64} {
  func.func @_se_kernel(%arg0: i32, %arg1: memref<1x64x32xf32, #tpu.memory_space<vmem>>, %arg2: memref<32x2xf32, #tpu.memory_space<vmem>>, %arg3: memref<2x32xf32, #tpu.memory_space<vmem>>, %arg4: memref<1x64x32xf32, #tpu.memory_space<vmem>>) attributes {dimension_semantics = [#tpu.dimension_semantics<parallel>], iteration_bounds = array<i64: 2>, scalar_prefetch = 0 : i64, scratch_operands = 0 : i64, tpu.core_type = #tpu.core_type<tc>, window_params = [{transform_indices = @transform_0, window_bounds = array<i64: 1, 64, 32>}, {pipeline_mode = #tpu.pipeline_mode<synchronous>, transform_indices = @transform_1, window_bounds = array<i64: 32, 2>}, {pipeline_mode = #tpu.pipeline_mode<synchronous>, transform_indices = @transform_2, window_bounds = array<i64: 2, 32>}, {transform_indices = @transform_3, window_bounds = array<i64: 1, 64, 32>}]} {
    %c0 = arith.constant 0 : index
    %c0_0 = arith.constant 0 : index
    %c0_1 = arith.constant 0 : index
    %0 = vector.load %arg1[%c0, %c0_0, %c0_1] : memref<1x64x32xf32, #tpu.memory_space<vmem>>, vector<1x64x32xf32>
    %cst = arith.constant dense<0.000000e+00> : vector<1x32xf32>
    %1 = vector.multi_reduction <add>, %0, %cst [1] : vector<1x64x32xf32> to vector<1x32xf32>
    %cst_2 = arith.constant 6.400000e+01 : f32
    %2 = vector.broadcast %cst_2 : f32 to vector<1x32xf32>
    %3 = arith.divf %1, %2 : vector<1x32xf32>
    %c0_3 = arith.constant 0 : index
    %c0_4 = arith.constant 0 : index
    %4 = vector.load %arg2[%c0_3, %c0_4] : memref<32x2xf32, #tpu.memory_space<vmem>>, vector<32x2xf32>
    %cst_5 = arith.constant dense<0.000000e+00> : vector<1x2xf32>
    %5 = tpu.matmul %3, %4, %cst_5 {dimension_numbers = #tpu.dot_dimension_numbers<[1], [0], [0], [1], [0, 0, 1, 1], [], []>} : vector<1x32xf32>, vector<32x2xf32>, vector<1x2xf32> -> vector<1x2xf32>
    %cst_6 = arith.constant 0.000000e+00 : f32
    %6 = vector.broadcast %cst_6 : f32 to vector<1x2xf32>
    %7 = arith.maximumf %5, %6 : vector<1x2xf32>
    %c0_7 = arith.constant 0 : index
    %c0_8 = arith.constant 0 : index
    %8 = vector.load %arg3[%c0_7, %c0_8] : memref<2x32xf32, #tpu.memory_space<vmem>>, vector<2x32xf32>
    %cst_9 = arith.constant dense<0.000000e+00> : vector<1x32xf32>
    %9 = tpu.matmul %7, %8, %cst_9 {dimension_numbers = #tpu.dot_dimension_numbers<[1], [0], [0], [1], [0, 0, 1, 1], [], []>} : vector<1x2xf32>, vector<2x32xf32>, vector<1x32xf32> -> vector<1x32xf32>
    %10 = arith.negf %9 : vector<1x32xf32>
    %11 = math.exp %10 : vector<1x32xf32>
    %cst_10 = arith.constant 1.000000e+00 : f32
    %12 = vector.broadcast %cst_10 : f32 to vector<1x32xf32>
    %13 = arith.addf %12, %11 : vector<1x32xf32>
    %14 = arith.divf %12, %13 : vector<1x32xf32>
    %c0_11 = arith.constant 0 : index
    %c0_12 = arith.constant 0 : index
    %c0_13 = arith.constant 0 : index
    %15 = vector.load %arg1[%c0_11, %c0_12, %c0_13] : memref<1x64x32xf32, #tpu.memory_space<vmem>>, vector<1x64x32xf32>
    %16 = vector.shape_cast %14 : vector<1x32xf32> to vector<1x1x32xf32>
    %17 = vector.broadcast %16 : vector<1x1x32xf32> to vector<1x64x32xf32>
    %18 = arith.mulf %15, %17 : vector<1x64x32xf32>
    %c0_14 = arith.constant 0 : index
    %c0_15 = arith.constant 0 : index
    %c0_16 = arith.constant 0 : index
    %19 = vector.load %arg4[%c0_14, %c0_15, %c0_16] : memref<1x64x32xf32, #tpu.memory_space<vmem>>, vector<1x64x32xf32>
    tpu.vector_store %arg4[%c0_14, %c0_15, %c0_16], %18 {strides = array<i32>} : memref<1x64x32xf32, #tpu.memory_space<vmem>>, vector<1x64x32xf32>,
    return
  }
  func.func @transform_0(%arg0: i32) -> (i32, i32, i32) {
    %c0_i32 = arith.constant 0 : i32
    %c0_i32_0 = arith.constant 0 : i32
    %c0_i32_1 = arith.constant 0 : i32
    return %arg0, %c0_i32, %c0_i32_0 : i32, i32, i32
  }
  func.func @transform_1(%arg0: i32) -> (i32, i32) {
    %c0_i32 = arith.constant 0 : i32
    %c0_i32_0 = arith.constant 0 : i32
    %c0_i32_1 = arith.constant 0 : i32
    return %c0_i32, %c0_i32_0 : i32, i32
  }
  func.func @transform_2(%arg0: i32) -> (i32, i32) {
    %c0_i32 = arith.constant 0 : i32
    %c0_i32_0 = arith.constant 0 : i32
    %c0_i32_1 = arith.constant 0 : i32
    return %c0_i32, %c0_i32_0 : i32, i32
  }
  func.func @transform_3(%arg0: i32) -> (i32, i32, i32) {
    %c0_i32 = arith.constant 0 : i32
    %c0_i32_0 = arith.constant 0 : i32
    %c0_i32_1 = arith.constant 0 : i32
    return %arg0, %c0_i32, %c0_i32_0 : i32, i32, i32
  }
}

</mosaic_0001>

<llo_original>
// kernel: tpu_custom_call.1
$region0: #{tpu_custom_call.1}
  #allocation0 [shape = 'u32[]', space=smem, size = 0x4, offset = 0x4, fixed_abs, tag = 'smem constant byte address 0x4 - core index']
  #allocation1 [shape = 'u32[72,128]{1,0:T(1,128)}', space=vmem, size = 0x9000, scoped, tag = 'internal scratch']
  %s0 = inlined_call_operand.vmem [shape: f32[2,64,32], index: 0, kind: input, shape index: {}]
  %s1 = inlined_call_operand.vmem [shape: f32[32,2], index: 1, kind: input, shape index: {}]
  %s2 = inlined_call_operand.vmem [shape: f32[2,32], index: 2, kind: input, shape index: {}]
  %s3 = inlined_call_operand.vmem [shape: f32[2,64,32], index: 3, kind: output, shape index: {}]
  %s4 = sld [smem:[#allocation0]]
  $region45: #{tpu_custom_call.1} parent=0
    _
  %s6 = ssub.s32 1, %s4
  %s7 = scalar_select 0, %s6, %s4
  loop: start=0, step=1, limit=4
  $region2: #{tpu_custom_call.1} parent=0 // loop_pre_header
    _
  $region3: #{tpu_custom_call.1} parent=0 // loop_header
    %s9 = sphi 0, %s13
    %p10 = scmp.ge.s32.totalorder %s9, 4
    %s19 = sphi 0, %s21
    %s22 = sphi 0, %s19
    %s23 = sphi 0, %s22
    %s39 = sphi 0, %s23
    %s43 = sphi 0, %s43
    %s45 = sphi 0, %s43
    %s46 = sphi 0, %s45
    %s60 = sphi 0, %s46
    %s64 = sphi 0, %s64
    %s66 = sphi 0, %s64
    %s67 = sphi 0, %s66
    %s81 = sphi 0, %s67
    %s87 = sphi 0, %s89
    %s90 = sphi 0, %s87
    %s91 = sphi 0, %s90
    %s107 = sphi 0, %s91
  $region4: #{tpu_custom_call.1} parent=0 // loop_header_branch
    %12 = sbr.rel (%p10) target = $region8
  $region5: #{tpu_custom_call.1} parent=0 // loop_body
    %s14 = ssub.s32 %s9, 1
    %s15 = ssub.s32 %s9, 2
    %s16 = sadd.s32 %s9, 1
    %s17 = ssub.s32 %s9, %s16
    %p18 = scmp.eq.s32.totalorder %s17, 0
    %s20 = sadd.s32 %s19, 1
    %s21 = scalar_select %p18, %s19, %s20
    %p24 = pneg %p18
    %p25 = scmp.eq.s32.totalorder %s9, 1
    %p26 = por %p24, %p25
    %p27 = scmp.ne.s32.totalorder %s19, %s22
    %p28 = scmp.eq.s32.totalorder %s9, 0
    %p29 = por %p27, %p28
    %p30 = scmp.ne.s32.totalorder %s19, %s22
    %p31 = scmp.eq.s32.totalorder %s14, 1
    %p32 = por %p30, %p31
    %p33 = scmp.ne.s32.totalorder %s22, %s23
    %p34 = scmp.eq.s32.totalorder %s14, 0
    %p35 = por %p33, %p34
    %p36 = scmp.ne.s32.totalorder %s22, %s23
    %p37 = scmp.eq.s32.totalorder %s15, 1
    %p38 = por %p36, %p37
    %p40 = scmp.ne.s32.totalorder %s23, %s39
    %p41 = scmp.eq.s32.totalorder %s15, 0
    %p42 = por %p40, %p41
    %s44 = sadd.s32 %s43, 1
    %p47 = scmp.eq.s32.totalorder %s9, 1
    %p48 = scmp.ne.s32.totalorder %s43, %s45
    %p49 = scmp.eq.s32.totalorder %s9, 0
    %p50 = por %p48, %p49
    %p51 = scmp.ne.s32.totalorder %s43, %s45
    %p52 = scmp.eq.s32.totalorder %s14, 1
    %p53 = por %p51, %p52
    %p54 = scmp.ne.s32.totalorder %s45, %s46
    %p55 = scmp.eq.s32.totalorder %s14, 0
    %p56 = por %p54, %p55
    %p57 = scmp.ne.s32.totalorder %s45, %s46
    %p58 = scmp.eq.s32.totalorder %s15, 1
    %p59 = por %p57, %p58
    %p61 = scmp.ne.s32.totalorder %s46, %s60
    %p62 = scmp.eq.s32.totalorder %s15, 0
    %p63 = por %p61, %p62
    %s65 = sadd.s32 %s64, 1
    %p68 = scmp.eq.s32.totalorder %s9, 1
    %p69 = scmp.ne.s32.totalorder %s64, %s66
    %p70 = scmp.eq.s32.totalorder %s9, 0
    %p71 = por %p69, %p70
    %p72 = scmp.ne.s32.totalorder %s64, %s66
    %p73 = scmp.eq.s32.totalorder %s14, 1
    %p74 = por %p72, %p73
    %p75 = scmp.ne.s32.totalorder %s66, %s67
    %p76 = scmp.eq.s32.totalorder %s14, 0
    %p77 = por %p75, %p76
    %p78 = scmp.ne.s32.totalorder %s66, %s67
    %p79 = scmp.eq.s32.totalorder %s15, 1
    %p80 = por %p78, %p79
    %p82 = scmp.ne.s32.totalorder %s67, %s81
    %p83 = scmp.eq.s32.totalorder %s15, 0
    %p84 = por %p82, %p83
    %s85 = ssub.s32 %s9, %s16
    %p86 = scmp.eq.s32.totalorder %s85, 0
    %s88 = sadd.s32 %s87, 1
    %s89 = scalar_select %p86, %s87, %s88
    %p92 = pneg %p86
    %p93 = scmp.eq.s32.totalorder %s9, 1
    %p94 = por %p92, %p93
    %p95 = scmp.ne.s32.totalorder %s87, %s90
    %p96 = scmp.eq.s32.totalorder %s9, 0
    %p97 = por %p95, %p96
    %p98 = scmp.ne.s32.totalorder %s87, %s90
    %p99 = scmp.eq.s32.totalorder %s14, 1
    %p100 = por %p98, %p99
    %p101 = scmp.ne.s32.totalorder %s90, %s91
    %p102 = scmp.eq.s32.totalorder %s14, 0
    %p103 = por %p101, %p102
    %p104 = scmp.ne.s32.totalorder %s90, %s91
    %p105 = scmp.eq.s32.totalorder %s15, 1
    %p106 = por %p104, %p105
    %p108 = scmp.ne.s32.totalorder %s91, %s107
    %p109 = scmp.eq.s32.totalorder %s15, 0
    %p110 = por %p108, %p109
    %p111 = scmp.le.s32.totalorder 1, %s9
    %p112 = scmp.lt.s32.totalorder %s9, 3
    %p113 = pnand %p111, %p112
    %p114 = pneg %p113
    // Predicated region
    $region9: #{tpu_custom_call.1} parent=5 // pred_check
      _
    $region10: #{tpu_custom_call.1} parent=5 // pred_check_branch
      %116 = sbr.rel (%p113) target = $region12
    $region11: #{tpu_custom_call.1} parent=5 // pred_region
      %s117 = ssub.s32 %s9, 1
      // Predicated region
      $region13: #{tpu_custom_call.1} parent=11 // pred_check
        %p118 = pneg %p56
      $region14: #{tpu_custom_call.1} parent=11 // pred_check_branch
        %120 = sbr.rel (%p118) target = $region16
      $region15: #{tpu_custom_call.1} parent=11 // pred_region
        _
      $region16: #{tpu_custom_call.1} parent=11 // pred_fallthru
        _
      // Predicated region
      $region17: #{tpu_custom_call.1} parent=11 // pred_check
        %p121 = pneg %p77
      $region18: #{tpu_custom_call.1} parent=11 // pred_check_branch
        %123 = sbr.rel (%p121) target = $region20
      $region19: #{tpu_custom_call.1} parent=11 // pred_region
        _
      $region20: #{tpu_custom_call.1} parent=11 // pred_fallthru
        _
    $region12: #{tpu_custom_call.1} parent=5 // pred_fallthru
      _
    %p124 = scmp.lt.s32.totalorder %s9, 2
    // Predicated region
    $region21: #{tpu_custom_call.1} parent=5 // pred_check
      %p125 = pneg %p124
    $region22: #{tpu_custom_call.1} parent=5 // pred_check_branch
      %127 = sbr.rel (%p125) target = $region24
    $region23: #{tpu_custom_call.1} parent=5 // pred_region
      // Predicated region
      $region25: #{tpu_custom_call.1} parent=23 // pred_check
        %p128 = pneg %p29
      $region26: #{tpu_custom_call.1} parent=23 // pred_check_branch
        %130 = sbr.rel (%p128) target = $region28
      $region27: #{tpu_custom_call.1} parent=23 // pred_region
        %p131 = scmp.lt.s32.totalorder %s9, 1
        %s132 = scalar_select %p131, %s9, 1
        %s133 = smul.addr %s132, 8
        %s134 = smul.addr %s133, 8
        %s135 = scalar_lea.vmem %s0, %s134
      $region28: #{tpu_custom_call.1} parent=23 // pred_fallthru
        _
    $region24: #{tpu_custom_call.1} parent=5 // pred_fallthru
      _
    %p136 = scmp.le.s32.totalorder 1, %s9
    %p137 = scmp.lt.s32.totalorder %s9, 3
    %p138 = pnand %p136, %p137
    %p139 = pneg %p138
    // Predicated region
    $region29: #{tpu_custom_call.1} parent=5 // pred_check
      _
    $region30: #{tpu_custom_call.1} parent=5 // pred_check_branch
      %141 = sbr.rel (%p138) target = $region32
    $region31: #{tpu_custom_call.1} parent=5 // pred_region
      %s142 = ssub.s32 %s9, 1
      %p143 = scmp.lt.s32.totalorder %s14, 1
      %s144 = scalar_select %p143, %s14, 1
      %s145 = smul.addr %s144, 8
      %s146 = smul.addr %s145, 8
      %s147 = scalar_lea.vmem %s0, %s146
      %p148 = pneg %p35
      %p149 = pneg %p32
      %p150 = pneg %p56
      %p151 = pneg %p53
      %p152 = pneg %p77
      %p153 = pneg %p74
      %p154 = pneg %p103
      %p155 = pneg %p100
      %p156 = scmp.lt.s32.totalorder %s14, 1
      %s157 = scalar_select %p156, %s14, 1
      %s158 = smul.addr %s157, 8
      %s159 = smul.addr %s158, 8
      %s160 = scalar_lea.vmem %s3, %s159
      %p161 = scmp.lt.s32.totalorder %s14, 1
      %s162 = scalar_select %p161, %s14, 1
      %s163 = smul.addr %s162, 8
      %s164 = smul.addr %s163, 8
      %s165 = scalar_lea.vmem %s0, %s164
      %p166 = scmp.lt.s32.totalorder %s14, 1
      %s167 = scalar_select %p166, %s14, 1
      %s168 = smul.addr %s167, 8
      %s169 = smul.addr %s168, 8
      %s170 = scalar_lea.vmem %s3, %s169
      %v171 = vld [vmem:[%s165] sm:$0xff]
      %v172 = vld [vmem:[%s165 + $0x8] sm:$0xff]
      %v173 = vld [vmem:[%s165 + $0x10] sm:$0xff]
      %v174 = vld [vmem:[%s165 + $0x18] sm:$0xff]
      %v175 = vld [vmem:[%s165 + $0x20] sm:$0xff]
      %v176 = vld [vmem:[%s165 + $0x28] sm:$0xff]
      %v177 = vld [vmem:[%s165 + $0x30] sm:$0xff]
      %v178 = vld [vmem:[%s165 + $0x38] sm:$0xff]
      %vm179 = vcmask 261120
      %v180 = vsel %vm179, %v171, 0.0
      %v181 = vsel %vm179, %v172, 0.0
      %v182 = vadd.f32 %v180, %v181
      %v183 = vsel %vm179, %v173, 0.0
      %v184 = vadd.f32 %v182, %v183
      %v185 = vsel %vm179, %v174, 0.0
      %v186 = vadd.f32 %v184, %v185
      %v187 = vsel %vm179, %v175, 0.0
      %v188 = vadd.f32 %v186, %v187
      %v189 = vsel %vm179, %v176, 0.0
      %v190 = vadd.f32 %v188, %v189
      %v191 = vsel %vm179, %v177, 0.0
      %v192 = vadd.f32 %v190, %v191
      %v193 = vsel %vm179, %v178, 0.0
      %v194 = vadd.f32 %v192, %v193
      %v195 = vrot.slane %v194, 4
      %v196 = vadd.f32 %v194, %v195
      %v197 = vrot.slane %v196, 2
      %v198 = vadd.f32 %v196, %v197
      %v199 = vrot.slane %v198, 1
      %v200 = vadd.f32 %v198, %v199
      %v201 = vrcp.pop 64.0
      %v202 = vmul.f32 64.0, %v201
      %v203 = vsub.f32 1.0, %v202
      %v204 = vmul.f32 %v201, %v203
      %v205 = vadd.f32 %v201, %v204
      %vm206 = vweird.f32 %v201
      %v207 = vsel %vm206, %v201, %v205
      %v208 = vmul.f32 %v200, %v207
      %v209 = vld [vmem:[%s1] sm:$0xff]
      %v210 = vld [vmem:[%s1 + $0x8] sm:$0xff]
      %v211 = vld [vmem:[%s1 + $0x10] sm:$0xff]
      %v212 = vld [vmem:[%s1 + $0x18] sm:$0xff]
      %v214 = vsel %vm179, %v208, 0
      %216 = vmatpush.msra.mxu0 0.0
      %217 = vmatpush.msra.mxu0 0.0
      %218 = vmatpush.msra.mxu0 0.0
      %219 = vmatpush.msra.mxu0 0.0
      %220 = vmatpush.msra.mxu0 0.0
      %221 = vmatpush.msra.mxu0 0.0
      %222 = vmatpush.msra.mxu0 0.0
      %223 = vmatpush.msra.mxu0 0.0
      %224 = vmatpush.msra.mxu0 0.0
      %225 = vmatpush.msra.mxu0 0.0
      %226 = vmatpush.msra.mxu0 0.0
      %227 = vmatpush.msra.mxu0 0.0
      %228 = vmatpush.msra.mxu0 %v212
      %229 = vmatpush.msra.mxu0 %v211
      %230 = vmatpush.msra.mxu0 %v210
      %231 = vmatpush.msra.mxu0 %v209
      %232 = vmatmul.f32.gmra.mxu0 %v214
      %v233 = vpop.f32.mrf.mxu0
      %v234 = vadd.f32 0.0, %v233
      %235 = vdwg.mxu0
      %v236 = vmax.f32 %v234, 0.0
      %v237 = vld [vmem:[%s2] sm:$0x3]
      %vm238 = vcmask 15360
      %v240 = vsel %vm238, %v236, 0
      %vm242 = vcmask 1041408
      %v244 = vsel %vm242, %v237, 0
      %246 = vmatpush.msra.mxu0 0.0
      %247 = vmatpush.msra.mxu0 0.0
      %248 = vmatpush.msra.mxu0 0.0
      %249 = vmatpush.msra.mxu0 0.0
      %250 = vmatpush.msra.mxu0 0.0
      %251 = vmatpush.msra.mxu0 0.0
      %252 = vmatpush.msra.mxu0 0.0
      %253 = vmatpush.msra.mxu0 0.0
      %254 = vmatpush.msra.mxu0 0.0
      %255 = vmatpush.msra.mxu0 0.0
      %256 = vmatpush.msra.mxu0 0.0
      %257 = vmatpush.msra.mxu0 0.0
      %258 = vmatpush.msra.mxu0 0.0
      %259 = vmatpush.msra.mxu0 0.0
      %260 = vmatpush.msra.mxu0 0.0
      %261 = vmatpush.msra.mxu0 %v244
      %262 = vmatmul.f32.gmra.mxu0 %v240
      %v263 = vpop.f32.mrf.mxu0
      %v264 = vadd.f32 0.0, %v263
      %265 = vdwg.mxu0
      %v266 = vxor.u32 %v264, 2147483648
      %v267 = vmul.f32 %v266, 1.442695
      %v268 = vpow.pop %v267
      %v269 = vadd.f32 %v268, 1.0
      %v270 = vrcp.pop %v269
      %v271 = vmul.f32 %v269, %v270
      %v272 = vsub.f32 1.0, %v271
      %v273 = vmul.f32 %v270, %v272
      %v274 = vadd.f32 %v270, %v273
      %vm275 = vweird.f32 %v269
      %vm276 = vweird.f32 %v270
      %vm277 = vmor %vm275, %vm276
      %v278 = vsel %vm277, %v270, %v274
      %v279 = vand.u32 2147483647, %v269
      %vm280 = vcmp.eq.f32.partialorder %v279, 8.507059e+37
      %v281 = vand.u32 %v269, 2147483648
      %v282 = vor.u32 1.1754944e-38, %v281
      %v283 = vsel %vm280, %v282, %v278
      %v284 = vmul.f32 1.0, %v283
      %v285 = vperm.slane %v284, 0
      %v286 = vmul.f32 %v171, %v285
      %v287 = vmul.f32 %v172, %v285
      %v288 = vmul.f32 %v173, %v285
      %v289 = vmul.f32 %v174, %v285
      %v290 = vmul.f32 %v175, %v285
      %v291 = vmul.f32 %v176, %v285
      %v292 = vmul.f32 %v177, %v285
      %v293 = vmul.f32 %v178, %v285
      %294 = vst.msk [vmem:[%s170] sm:$0xff] %vm179, %v286
      %295 = vst.msk [vmem:[%s170 + $0x8] sm:$0xff] %vm179, %v287
      %296 = vst.msk [vmem:[%s170 + $0x10] sm:$0xff] %vm179, %v288
      %297 = vst.msk [vmem:[%s170 + $0x18] sm:$0xff] %vm179, %v289
      %298 = vst.msk [vmem:[%s170 + $0x20] sm:$0xff] %vm179, %v290
      %299 = vst.msk [vmem:[%s170 + $0x28] sm:$0xff] %vm179, %v291
      %300 = vst.msk [vmem:[%s170 + $0x30] sm:$0xff] %vm179, %v292
      %301 = vst.msk [vmem:[%s170 + $0x38] sm:$0xff] %vm179, %v293
      %p302 = scmp.lt.s32.totalorder %s14, 1
      %s303 = scalar_select %p302, %s14, 1
      %s304 = smul.addr %s303, 8
      %s305 = smul.addr %s304, 8
      %s306 = scalar_lea.vmem %s3, %s305
      // Predicated region
      $region33: #{tpu_custom_call.1} parent=31 // pred_check
        %p307 = pneg %p100
      $region34: #{tpu_custom_call.1} parent=31 // pred_check_branch
        %309 = sbr.rel (%p307) target = $region36
      $region35: #{tpu_custom_call.1} parent=31 // pred_region
        _
      $region36: #{tpu_custom_call.1} parent=31 // pred_fallthru
        _
    $region32: #{tpu_custom_call.1} parent=5 // pred_fallthru
      _
    %p310 = scmp.le.s32.totalorder 2, %s9
    // Predicated region
    $region37: #{tpu_custom_call.1} parent=5 // pred_check
      %p311 = pneg %p310
    $region38: #{tpu_custom_call.1} parent=5 // pred_check_branch
      %313 = sbr.rel (%p311) target = $region40
    $region39: #{tpu_custom_call.1} parent=5 // pred_region
      %s314 = ssub.s32 %s9, 2
      // Predicated region
      $region41: #{tpu_custom_call.1} parent=39 // pred_check
        %p315 = pneg %p106
      $region42: #{tpu_custom_call.1} parent=39 // pred_check_branch
        %317 = sbr.rel (%p315) target = $region44
      $region43: #{tpu_custom_call.1} parent=39 // pred_region
        %p318 = scmp.lt.s32.totalorder %s15, 1
        %s319 = scalar_select %p318, %s15, 1
        %s320 = smul.addr %s319, 8
        %s321 = smul.addr %s320, 8
        %s322 = scalar_lea.vmem %s3, %s321
      $region44: #{tpu_custom_call.1} parent=39 // pred_fallthru
        _
    $region40: #{tpu_custom_call.1} parent=5 // pred_fallthru
      _
  $region6: #{tpu_custom_call.1} parent=0 // loop_footer
    %s13 = sadd.s32 1, %s9
  $region7: #{tpu_custom_call.1} parent=0 // loop_footer_branch
    %8 = sbr.rel target = $region3
  $region8: #{tpu_custom_call.1} parent=0 // loop_exit
    _

</llo_original>
